<compile_context>
chip_gen: v6e
topology: v6e:2x2x1
jax: 0.10.0
libtpu: 0.0.40
codegen_flags: <defaults>
</compile_context>

<pallas_src>
import functools

import jax
import jax.numpy as jnp
from jax.experimental import pallas as pl
from jax.experimental.pallas import tpu as pltpu


def _round_up(x, m):
    return ((x + m - 1) // m) * m


# ------------------------------- Pallas kernel -------------------------------

def _gate_kernel(x1_ref, x2_ref, wru1_ref, wru2_ref, bru_ref,
                 wp1_ref, wp2_ref, bp_ref, o_ref):
    """Fused GateLayer tile: (tm, E) rows of x1 and (tm, 2E) rows of x2."""
    x1 = x1_ref[...]                         # (tm, E)  f32
    x2 = x2_ref[...]                         # (tm, 2E) f32
    x1b = x1.astype(jnp.bfloat16)            # MXU operands in bf16
    x2b = x2.astype(jnp.bfloat16)

    # Fused reset|update:  [x1, x2] @ W_ru  ==  x1 @ W_ru[:E] + x2 @ W_ru[E:]
    ru = (jnp.dot(x1b, wru1_ref[...], preferred_element_type=jnp.float32)
          + jnp.dot(x2b, wru2_ref[...], preferred_element_type=jnp.float32)
          + bru_ref[...])                    # (tm, 2E) f32
    ru = jax.nn.sigmoid(ru)                  # element-wise math in f32

    E = o_ref.shape[-1]
    reset = ru[:, :E]
    update = ru[:, E:]

    # Proposal: [reset*x1, x2] @ W_p  ==  (reset*x1) @ W_p[:E] + x2 @ W_p[E:]
    rx1 = (reset * x1).astype(jnp.bfloat16)
    prop = (jnp.dot(rx1, wp1_ref[...], preferred_element_type=jnp.float32)
            + jnp.dot(x2b, wp2_ref[...], preferred_element_type=jnp.float32)
            + bp_ref[...])
    prop = jnp.tanh(prop)

    # Gate combine fused into the epilogue.
    o_ref[...] = (1.0 - update) * x1 + update * prop


# --------------------------------- wrapper -----------------------------------

def gate_layer(params, x1, x2, *, block_rows=256):
    """GateLayer forward.  x1: (..., E), x2: (..., 2E)  ->  (..., E)."""
    E = x1.shape[-1]
    assert x2.shape[-1] == 2 * E, (x1.shape, x2.shape)

    x1_2d = x1.reshape(-1, E).astype(jnp.float32)
    x2_2d = x2.reshape(-1, 2 * E).astype(jnp.float32)
    M = x1_2d.shape[0]

    # Row-tile: multiple of 8 (sublane), capped at block_rows; pad M to a
    # multiple of the tile (padded rows are computed and discarded).
    tm = min(block_rows, _round_up(M, 8))
    Mp = _round_up(M, tm)
    if Mp != M:
        pad = Mp - M
        x1_2d = jnp.pad(x1_2d, ((0, pad), (0, 0)))
        x2_2d = jnp.pad(x2_2d, ((0, pad), (0, 0)))

    bf16 = jnp.bfloat16
    wru1 = params["w_ru_x1"].astype(bf16)        # (E, 2E)
    wru2 = params["w_ru_x2"].astype(bf16)        # (2E, 2E)
    bru = params["b_ru"].reshape(1, 2 * E).astype(jnp.float32)
    wp1 = params["w_p_rx1"].astype(bf16)         # (E, E)
    wp2 = params["w_p_x2"].astype(bf16)          # (2E, E)
    bp = params["b_p"].reshape(1, E).astype(jnp.float32)

    grid = (Mp // tm,)
    out = pl.pallas_call(
        _gate_kernel,
        out_shape=jax.ShapeDtypeStruct((Mp, E), jnp.float32),
        grid=grid,
        in_specs=[
            pl.BlockSpec((tm, E), lambda i: (i, 0)),        # x1 rows
            pl.BlockSpec((tm, 2 * E), lambda i: (i, 0)),    # x2 rows
            pl.BlockSpec((E, 2 * E), lambda i: (0, 0)),     # W_ru (x1 part)
            pl.BlockSpec((2 * E, 2 * E), lambda i: (0, 0)),  # W_ru (x2 part)
            pl.BlockSpec((1, 2 * E), lambda i: (0, 0)),     # b_ru
            pl.BlockSpec((E, E), lambda i: (0, 0)),         # W_p (reset*x1 part)
            pl.BlockSpec((2 * E, E), lambda i: (0, 0)),     # W_p (x2 part)
            pl.BlockSpec((1, E), lambda i: (0, 0)),         # b_p
        ],
        out_specs=pl.BlockSpec((tm, E), lambda i: (i, 0)),
        compiler_params=pltpu.CompilerParams(
            dimension_semantics=("parallel",),
            vmem_limit_bytes=48 * 1024 * 1024,   # explicit: v7x TC has 64 MiB
        ),
    )(x1_2d, x2_2d, wru1, wru2, bru, wp1, wp2, bp)

    return out[:M].reshape(x1.shape)


# ---------------------- parameters (nn.Linear layout) ------------------------

def init_gate_params(key, dim_model):
    """Create PyTorch-layout weights and the fused/split kernel layout."""
    E = dim_model
    k = jax.random.split(key, 6)
    # nn.Linear(dim*3, dim): weight (E, 3E), bias (E,)
    W_r = 0.05 * jax.random.normal(k[0], (E, 3 * E), jnp.float32)
    b_r = 0.05 * jax.random.normal(k[1], (E,), jnp.float32)
    W_u = 0.05 * jax.random.normal(k[2], (E, 3 * E), jnp.float32)
    b_u = 0.05 * jax.random.normal(k[3], (E,), jnp.float32)
    W_p = 0.05 * jax.random.normal(k[4], (E, 3 * E), jnp.float32)
    b_p = 0.05 * jax.random.normal(k[5], (E,), jnp.float32)

    torch_params = {"W_r": W_r, "b_r": b_r, "W_u": W_u, "b_u": b_u,
                    "W_p": W_p, "b_p": b_p}

    # Fused kernel layout (weights stored as (in, out)):
    #   [x1, x2] @ concat([W_r.T, W_u.T], out-axis)  split by input rows.
    kernel_params = {
        "w_ru_x1": jnp.concatenate([W_r[:, :E].T, W_u[:, :E].T], axis=1),   # (E, 2E)
        "w_ru_x2": jnp.concatenate([W_r[:, E:].T, W_u[:, E:].T], axis=1),   # (2E, 2E)
        "b_ru": jnp.concatenate([b_r, b_u]),                                 # (2E,)
        "w_p_rx1": W_p[:, :E].T,                                             # (E, E)
        "w_p_x2": W_p[:, E:].T,                                              # (2E, E)
        "b_p": b_p,                                                          # (E,)
    }
    return torch_params, kernel_params


def gate_layer_ref(tp, x1, x2):
    """Pure-JAX f32 reference matching the PyTorch module exactly."""
    cat = jnp.concatenate([x1, x2], axis=-1)
    reset = jax.nn.sigmoid(cat @ tp["W_r"].T + tp["b_r"])
    update = jax.nn.sigmoid(cat @ tp["W_u"].T + tp["b_u"])
    prop = jnp.tanh(jnp.concatenate([reset * x1, x2], axis=-1) @ tp["W_p"].T + tp["b_p"])
    return (1.0 - update) * x1 + update * prop


# ------------------------------------ main ------------------------------------

if __name__ == "__main__":
    B, S, E = 2, 8, 32     # x1: (B, S, E), x2: (B, S, 2E) as in the model's call

    root = jax.random.PRNGKey(0)
    kp, k1, k2 = jax.random.split(root, 3)

    torch_params, kernel_params = init_gate_params(kp, E)

    x1 = jax.random.normal(k1, (B, S, E), jnp.float32)
    x2 = jax.random.normal(k2, (B, S, 2 * E), jnp.float32)

    fwd = jax.jit(functools.partial(gate_layer, block_rows=256))
    out = fwd(kernel_params, x1, x2)
    out = jax.block_until_ready(out)

    assert out.shape == (B, S, E), out.shape

    # Reference check (bf16 MXU operands with f32 accumulation -> loose tol).
    ref = gate_layer_ref(torch_params, x1, x2)
    max_err = float(jnp.max(jnp.abs(out - ref)))
    assert max_err < 2e-2, f"max abs error {max_err}"

    print("KERNEL_OK")
</pallas_src>

<mosaic_0001>
module attributes {stable_mosaic.version = 11 : i64} {
  func.func @_gate_kernel(%arg0: i32, %arg1: memref<16x32xf32, #tpu.memory_space<vmem>>, %arg2: memref<16x64xf32, #tpu.memory_space<vmem>>, %arg3: memref<32x64xbf16, #tpu.memory_space<vmem>>, %arg4: memref<64x64xbf16, #tpu.memory_space<vmem>>, %arg5: memref<1x64xf32, #tpu.memory_space<vmem>>, %arg6: memref<32x32xbf16, #tpu.memory_space<vmem>>, %arg7: memref<64x32xbf16, #tpu.memory_space<vmem>>, %arg8: memref<1x32xf32, #tpu.memory_space<vmem>>, %arg9: memref<16x32xf32, #tpu.memory_space<vmem>>) attributes {dimension_semantics = [#tpu.dimension_semantics<parallel>], iteration_bounds = array<i64: 1>, scalar_prefetch = 0 : i64, scratch_operands = 0 : i64, tpu.core_type = #tpu.core_type<tc>, window_params = [{transform_indices = @transform_0, window_bounds = array<i64: 16, 32>}, {transform_indices = @transform_1, window_bounds = array<i64: 16, 64>}, {pipeline_mode = #tpu.pipeline_mode<synchronous>, transform_indices = @transform_2, window_bounds = array<i64: 32, 64>}, {pipeline_mode = #tpu.pipeline_mode<synchronous>, transform_indices = @transform_3, window_bounds = array<i64: 64, 64>}, {pipeline_mode = #tpu.pipeline_mode<synchronous>, transform_indices = @transform_4, window_bounds = array<i64: 1, 64>}, {pipeline_mode = #tpu.pipeline_mode<synchronous>, transform_indices = @transform_5, window_bounds = array<i64: 32, 32>}, {pipeline_mode = #tpu.pipeline_mode<synchronous>, transform_indices = @transform_6, window_bounds = array<i64: 64, 32>}, {pipeline_mode = #tpu.pipeline_mode<synchronous>, transform_indices = @transform_7, window_bounds = array<i64: 1, 32>}, {transform_indices = @transform_8, window_bounds = array<i64: 16, 32>}]} {
    %c0 = arith.constant 0 : index
    %c0_0 = arith.constant 0 : index
    %0 = vector.load %arg1[%c0, %c0_0] : memref<16x32xf32, #tpu.memory_space<vmem>>, vector<16x32xf32>
    %c0_1 = arith.constant 0 : index
    %c0_2 = arith.constant 0 : index
    %1 = vector.load %arg2[%c0_1, %c0_2] : memref<16x64xf32, #tpu.memory_space<vmem>>, vector<16x64xf32>
    %2 = arith.truncf %0 : vector<16x32xf32> to vector<16x32xbf16>
    %3 = arith.truncf %1 : vector<16x64xf32> to vector<16x64xbf16>
    %c0_3 = arith.constant 0 : index
    %c0_4 = arith.constant 0 : index
    %4 = vector.load %arg3[%c0_3, %c0_4] : memref<32x64xbf16, #tpu.memory_space<vmem>>, vector<32x64xbf16>
    %cst = arith.constant dense<0.000000e+00> : vector<16x64xf32>
    %5 = tpu.matmul %2, %4, %cst {dimension_numbers = #tpu.dot_dimension_numbers<[1], [0], [0], [1], [0, 0, 1, 1], [], []>} : vector<16x32xbf16>, vector<32x64xbf16>, vector<16x64xf32> -> vector<16x64xf32>
    %c0_5 = arith.constant 0 : index
    %c0_6 = arith.constant 0 : index
    %6 = vector.load %arg4[%c0_5, %c0_6] : memref<64x64xbf16, #tpu.memory_space<vmem>>, vector<64x64xbf16>
    %cst_7 = arith.constant dense<0.000000e+00> : vector<16x64xf32>
    %7 = tpu.matmul %3, %6, %cst_7 {dimension_numbers = #tpu.dot_dimension_numbers<[1], [0], [0], [1], [0, 0, 1, 1], [], []>} : vector<16x64xbf16>, vector<64x64xbf16>, vector<16x64xf32> -> vector<16x64xf32>
    %8 = arith.addf %5, %7 : vector<16x64xf32>
    %c0_8 = arith.constant 0 : index
    %c0_9 = arith.constant 0 : index
    %9 = vector.load %arg5[%c0_8, %c0_9] : memref<1x64xf32, #tpu.memory_space<vmem>>, vector<1x64xf32>
    %10 = vector.broadcast %9 : vector<1x64xf32> to vector<16x64xf32>
    %11 = arith.addf %8, %10 : vector<16x64xf32>
    %12 = arith.negf %11 : vector<16x64xf32>
    %13 = math.exp %12 : vector<16x64xf32>
    %cst_10 = arith.constant 1.000000e+00 : f32
    %14 = vector.broadcast %cst_10 : f32 to vector<16x64xf32>
    %15 = arith.addf %14, %13 : vector<16x64xf32>
    %16 = arith.divf %14, %15 : vector<16x64xf32>
    %17 = vector.extract_strided_slice %16 {offsets = [0, 0], sizes = [16, 32], strides = [1, 1]} : vector<16x64xf32> to vector<16x32xf32>
    %18 = vector.extract_strided_slice %16 {offsets = [0, 32], sizes = [16, 32], strides = [1, 1]} : vector<16x64xf32> to vector<16x32xf32>
    %19 = arith.mulf %17, %0 : vector<16x32xf32>
    %20 = arith.truncf %19 : vector<16x32xf32> to vector<16x32xbf16>
    %c0_11 = arith.constant 0 : index
    %c0_12 = arith.constant 0 : index
    %21 = vector.load %arg6[%c0_11, %c0_12] : memref<32x32xbf16, #tpu.memory_space<vmem>>, vector<32x32xbf16>
    %cst_13 = arith.constant dense<0.000000e+00> : vector<16x32xf32>
    %22 = tpu.matmul %20, %21, %cst_13 {dimension_numbers = #tpu.dot_dimension_numbers<[1], [0], [0], [1], [0, 0, 1, 1], [], []>} : vector<16x32xbf16>, vector<32x32xbf16>, vector<16x32xf32> -> vector<16x32xf32>
    %c0_14 = arith.constant 0 : index
    %c0_15 = arith.constant 0 : index
    %23 = vector.load %arg7[%c0_14, %c0_15] : memref<64x32xbf16, #tpu.memory_space<vmem>>, vector<64x32xbf16>
    %cst_16 = arith.constant dense<0.000000e+00> : vector<16x32xf32>
    %24 = tpu.matmul %3, %23, %cst_16 {dimension_numbers = #tpu.dot_dimension_numbers<[1], [0], [0], [1], [0, 0, 1, 1], [], []>} : vector<16x64xbf16>, vector<64x32xbf16>, vector<16x32xf32> -> vector<16x32xf32>
    %25 = arith.addf %22, %24 : vector<16x32xf32>
    %c0_17 = arith.constant 0 : index
    %c0_18 = arith.constant 0 : index
    %26 = vector.load %arg8[%c0_17, %c0_18] : memref<1x32xf32, #tpu.memory_space<vmem>>, vector<1x32xf32>
    %27 = vector.broadcast %26 : vector<1x32xf32> to vector<16x32xf32>
    %28 = arith.addf %25, %27 : vector<16x32xf32>
    %29 = math.tanh %28 : vector<16x32xf32>
    %cst_19 = arith.constant 1.000000e+00 : f32
    %30 = vector.broadcast %cst_19 : f32 to vector<16x32xf32>
    %31 = arith.subf %30, %18 : vector<16x32xf32>
    %32 = arith.mulf %31, %0 : vector<16x32xf32>
    %33 = arith.mulf %18, %29 : vector<16x32xf32>
    %34 = arith.addf %32, %33 : vector<16x32xf32>
    %c0_20 = arith.constant 0 : index
    %c0_21 = arith.constant 0 : index
    %35 = vector.load %arg9[%c0_20, %c0_21] : memref<16x32xf32, #tpu.memory_space<vmem>>, vector<16x32xf32>
    tpu.vector_store %arg9[%c0_20, %c0_21], %34 {strides = array<i32>} : memref<16x32xf32, #tpu.memory_space<vmem>>, vector<16x32xf32>,
    return
  }
  func.func @transform_0(%arg0: i32) -> (i32, i32) {
    %c0_i32 = arith.constant 0 : i32
    %c0_i32_0 = arith.constant 0 : i32
    return %arg0, %c0_i32 : i32, i32
  }
  func.func @transform_1(%arg0: i32) -> (i32, i32) {
    %c0_i32 = arith.constant 0 : i32
    %c0_i32_0 = arith.constant 0 : i32
    return %arg0, %c0_i32 : i32, i32
  }
  func.func @transform_2(%arg0: i32) -> (i32, i32) {
    %c0_i32 = arith.constant 0 : i32
    %c0_i32_0 = arith.constant 0 : i32
    %c0_i32_1 = arith.constant 0 : i32
    return %c0_i32, %c0_i32_0 : i32, i32
  }
  func.func @transform_3(%arg0: i32) -> (i32, i32) {
    %c0_i32 = arith.constant 0 : i32
    %c0_i32_0 = arith.constant 0 : i32
    %c0_i32_1 = arith.constant 0 : i32
    return %c0_i32, %c0_i32_0 : i32, i32
  }
  func.func @transform_4(%arg0: i32) -> (i32, i32) {
    %c0_i32 = arith.constant 0 : i32
    %c0_i32_0 = arith.constant 0 : i32
    %c0_i32_1 = arith.constant 0 : i32
    return %c0_i32, %c0_i32_0 : i32, i32
  }
  func.func @transform_5(%arg0: i32) -> (i32, i32) {
    %c0_i32 = arith.constant 0 : i32
    %c0_i32_0 = arith.constant 0 : i32
    %c0_i32_1 = arith.constant 0 : i32
    return %c0_i32, %c0_i32_0 : i32, i32
  }
  func.func @transform_6(%arg0: i32) -> (i32, i32) {
    %c0_i32 = arith.constant 0 : i32
    %c0_i32_0 = arith.constant 0 : i32
    %c0_i32_1 = arith.constant 0 : i32
    return %c0_i32, %c0_i32_0 : i32, i32
  }
  func.func @transform_7(%arg0: i32) -> (i32, i32) {
    %c0_i32 = arith.constant 0 : i32
    %c0_i32_0 = arith.constant 0 : i32
    %c0_i32_1 = arith.constant 0 : i32
    return %c0_i32, %c0_i32_0 : i32, i32
  }
  func.func @transform_8(%arg0: i32) -> (i32, i32) {
    %c0_i32 = arith.constant 0 : i32
    %c0_i32_0 = arith.constant 0 : i32
    return %arg0, %c0_i32 : i32, i32
  }
}

</mosaic_0001>

<llo_original>
// kernel: gate_layer.1
$region0: #{gate_layer.1}
  #allocation0 [shape = 'u32[]', space=smem, size = 0x4, offset = 0x4, fixed_abs, tag = 'smem constant byte address 0x4 - core index']
  #allocation1 [shape = 'u32[144,128]{1,0:T(1,128)}', space=vmem, size = 0x12000, scoped, tag = 'internal scratch']
  %s0 = inlined_call_operand.vmem [shape: f32[16,32], index: 0, kind: input, shape index: {}]
  %s1 = inlined_call_operand.vmem [shape: f32[16,64], index: 1, kind: input, shape index: {}]
  %s2 = inlined_call_operand.vmem [shape: bf16[32,64], index: 2, kind: input, shape index: {}]
  %s3 = inlined_call_operand.vmem [shape: bf16[64,64], index: 3, kind: input, shape index: {}]
  %s4 = inlined_call_operand.vmem [shape: f32[1,64], index: 4, kind: input, shape index: {}]
  %s5 = inlined_call_operand.vmem [shape: bf16[32,32], index: 5, kind: input, shape index: {}]
  %s6 = inlined_call_operand.vmem [shape: bf16[64,32], index: 6, kind: input, shape index: {}]
  %s7 = inlined_call_operand.vmem [shape: f32[1,32], index: 7, kind: input, shape index: {}]
  %s8 = inlined_call_operand.hbm [shape: f32[16,32], index: 8, kind: output, shape index: {}]
  %s9 = sld [smem:[#allocation0]]
  $region42: #{gate_layer.1} parent=0
    _
  %s11 = ssub.s32 1, %s9
  %s12 = scalar_select 0, %s11, %s9
  $region1: #{gate_layer.1} parent=0
    #allocation2 [shape = 'u8[8192]{0}', space=vmem, size = 0x2000, scoped, tag = 'output window, operand 0, single buffered']
    #allocation3 [shape = 's32[1]{0}', space=sflag, size = 0x4, scoped, tag = 'scoped memory for gate_layer.1']
    %13 = vsyncpa [#allocation3], 0
    // Predicated region
    $region2: #{gate_layer.1} parent=1 // pred_check
      _
    $region3: #{gate_layer.1} parent=1 // pred_check_branch
      %15 = sbr.rel (0) target = $region5
    $region4: #{gate_layer.1} parent=1 // pred_region
      _
    $region5: #{gate_layer.1} parent=1 // pred_fallthru
      _
    // Predicated region
    $region6: #{gate_layer.1} parent=1 // pred_check
      _
    $region7: #{gate_layer.1} parent=1 // pred_check_branch
      %17 = sbr.rel (0) target = $region9
    $region8: #{gate_layer.1} parent=1 // pred_region
      _
    $region9: #{gate_layer.1} parent=1 // pred_fallthru
      _
    // Predicated region
    $region10: #{gate_layer.1} parent=1 // pred_check
      _
    $region11: #{gate_layer.1} parent=1 // pred_check_branch
      %19 = sbr.rel (0) target = $region13
    $region12: #{gate_layer.1} parent=1 // pred_region
      _
    $region13: #{gate_layer.1} parent=1 // pred_fallthru
      _
    // Predicated region
    $region14: #{gate_layer.1} parent=1 // pred_check
      _
    $region15: #{gate_layer.1} parent=1 // pred_check_branch
      %21 = sbr.rel (0) target = $region17
    $region16: #{gate_layer.1} parent=1 // pred_region
      _
    $region17: #{gate_layer.1} parent=1 // pred_fallthru
      _
    // Predicated region
    $region18: #{gate_layer.1} parent=1 // pred_check
      _
    $region19: #{gate_layer.1} parent=1 // pred_check_branch
      %23 = sbr.rel (0) target = $region21
    $region20: #{gate_layer.1} parent=1 // pred_region
      _
    $region21: #{gate_layer.1} parent=1 // pred_fallthru
      _
    // Predicated region
    $region22: #{gate_layer.1} parent=1 // pred_check
      _
    $region23: #{gate_layer.1} parent=1 // pred_check_branch
      %25 = sbr.rel (0) target = $region25
    $region24: #{gate_layer.1} parent=1 // pred_region
      _
    $region25: #{gate_layer.1} parent=1 // pred_fallthru
      _
    // Predicated region
    $region26: #{gate_layer.1} parent=1 // pred_check
      _
    $region27: #{gate_layer.1} parent=1 // pred_check_branch
      %27 = sbr.rel (0) target = $region29
    $region28: #{gate_layer.1} parent=1 // pred_region
      _
    $region29: #{gate_layer.1} parent=1 // pred_fallthru
      _
    // Predicated region
    $region30: #{gate_layer.1} parent=1 // pred_check
      _
    $region31: #{gate_layer.1} parent=1 // pred_check_branch
      %29 = sbr.rel (0) target = $region33
    $region32: #{gate_layer.1} parent=1 // pred_region
      _
    $region33: #{gate_layer.1} parent=1 // pred_fallthru
      _
    %v31 = vld [vmem:[%s0] sm:$0xff]
    %v32 = vld [vmem:[%s0 + $0x8] sm:$0xff]
    %v33 = vld [vmem:[%s1] sm:$0xff]
    %v34 = vld [vmem:[%s1 + $0x8] sm:$0xff]
    %v35 = vpack.c.bf16 %v32, %v31
    %v36 = vpack.c.bf16 %v34, %v33
    %v37 = vld [vmem:[%s2] sm:$0xf]
    %v38 = vld [vmem:[%s2 + $0x4] sm:$0xf]
    %v39 = vld [vmem:[%s2 + $0x8] sm:$0xf]
    %v40 = vld [vmem:[%s2 + $0xc] sm:$0xf]
    %v41 = vld [vmem:[%s3] sm:$0xf]
    %v42 = vld [vmem:[%s3 + $0x4] sm:$0xf]
    %v43 = vld [vmem:[%s3 + $0x8] sm:$0xf]
    %v44 = vld [vmem:[%s3 + $0xc] sm:$0xf]
    %v45 = vld [vmem:[%s3 + $0x10] sm:$0xf]
    %v46 = vld [vmem:[%s3 + $0x14] sm:$0xf]
    %v47 = vld [vmem:[%s3 + $0x18] sm:$0xf]
    %v48 = vld [vmem:[%s3 + $0x1c] sm:$0xf]
    %v57 = vunpack.c.l.b16 %v41
    %v58 = vunpack.c.l.b16 %v42
    %v59 = vunpack.c.l.b16 %v43
    %v60 = vunpack.c.l.b16 %v44
    %v61 = vunpack.c.l.b16 %v45
    %v62 = vunpack.c.l.b16 %v46
    %v63 = vunpack.c.l.b16 %v47
    %v64 = vunpack.c.l.b16 %v48
    %v65 = vpack.c.b16 %v58, %v57
    %v66 = vpack.c.b16 %v60, %v59
    %v67 = vpack.c.b16 %v62, %v61
    %v68 = vpack.c.b16 %v64, %v63
    %vm73 = vcmask 523264
    %v75 = vsel %vm73, %v36, 0
    %77 = vmatprep.subr.bf16.mxu0 0
    %78 = vmatpush1.bf16.msra.mxu0 0
    %79 = vmatprep.subr.bf16.mxu0 0
    %80 = vmatpush1.bf16.msra.mxu0 0
    %81 = vmatprep.subr.bf16.mxu0 0
    %82 = vmatpush1.bf16.msra.mxu0 0
    %83 = vmatprep.subr.bf16.mxu0 0
    %84 = vmatpush1.bf16.msra.mxu0 0
    %85 = vmatprep.subr.bf16.mxu0 0
    %86 = vmatpush1.bf16.msra.mxu0 %v68
    %87 = vmatprep.subr.bf16.mxu0 0
    %88 = vmatpush1.bf16.msra.mxu0 %v67
    %89 = vmatprep.subr.bf16.mxu0 0
    %90 = vmatpush1.bf16.msra.mxu0 %v66
    %91 = vmatprep.subr.bf16.mxu0 0
    %92 = vmatpush1.bf16.msra.mxu0 %v65
    %93 = vmatprep.subr.bf16.mxu0 0
    %94 = vmatpush2.bf16.msra.mxu0 0
    %95 = vmatprep.subr.bf16.mxu0 0
    %96 = vmatpush2.bf16.msra.mxu0 0
    %97 = vmatprep.subr.bf16.mxu0 0
    %98 = vmatpush2.bf16.msra.mxu0 0
    %99 = vmatprep.subr.bf16.mxu0 0
    %100 = vmatpush2.bf16.msra.mxu0 0
    %101 = vmatprep.subr.bf16.mxu0 0
    %102 = vmatpush2.bf16.msra.mxu0 0
    %103 = vmatprep.subr.bf16.mxu0 0
    %104 = vmatpush2.bf16.msra.mxu0 0
    %105 = vmatprep.subr.bf16.mxu0 0
    %106 = vmatpush2.bf16.msra.mxu0 0
    %107 = vmatprep.subr.bf16.mxu0 0
    %108 = vmatpush2.bf16.msra.mxu0 0
    %109 = vmatprep.mubr.bf16.mxu0 0
    %110 = vmatmul.mubr.bf16.gmra.mxu0 %v75
    %v111 = vpop.f32.mrf.mxu0
    %v112 = vadd.f32 0.0, %v111
    %v113 = vpop.f32.mrf.mxu0
    %v114 = vpop.f32.mrf.mxu0
    %v115 = vadd.f32 0.0, %v114
    %v116 = vpop.f32.mrf.mxu0
    %117 = vdwg.mxu0
    %v122 = vunpack.c.l.b16 %v37
    %v123 = vunpack.c.l.b16 %v38
    %v124 = vunpack.c.l.b16 %v39
    %v125 = vunpack.c.l.b16 %v40
    %v126 = vpack.c.b16 %v123, %v122
    %v127 = vpack.c.b16 %v125, %v124
    %vm130 = vcmask 261120
    %v132 = vsel %vm130, %v35, 0
    %134 = vmatprep.subr.bf16.mxu0 0
    %135 = vmatpush1.bf16.msra.mxu0 0
    %136 = vmatprep.subr.bf16.mxu0 0
    %137 = vmatpush1.bf16.msra.mxu0 0
    %138 = vmatprep.subr.bf16.mxu0 0
    %139 = vmatpush1.bf16.msra.mxu0 0
    %140 = vmatprep.subr.bf16.mxu0 0
    %141 = vmatpush1.bf16.msra.mxu0 0
    %142 = vmatprep.subr.bf16.mxu0 0
    %143 = vmatpush1.bf16.msra.mxu0 0
    %144 = vmatprep.subr.bf16.mxu0 0
    %145 = vmatpush1.bf16.msra.mxu0 0
    %146 = vmatprep.subr.bf16.mxu0 0
    %147 = vmatpush1.bf16.msra.mxu0 %v127
    %148 = vmatprep.subr.bf16.mxu0 0
    %149 = vmatpush1.bf16.msra.mxu0 %v126
    %150 = vmatprep.subr.bf16.mxu0 0
    %151 = vmatpush2.bf16.msra.mxu0 0
    %152 = vmatprep.subr.bf16.mxu0 0
    %153 = vmatpush2.bf16.msra.mxu0 0
    %154 = vmatprep.subr.bf16.mxu0 0
    %155 = vmatpush2.bf16.msra.mxu0 0
    %156 = vmatprep.subr.bf16.mxu0 0
    %157 = vmatpush2.bf16.msra.mxu0 0
    %158 = vmatprep.subr.bf16.mxu0 0
    %159 = vmatpush2.bf16.msra.mxu0 0
    %160 = vmatprep.subr.bf16.mxu0 0
    %161 = vmatpush2.bf16.msra.mxu0 0
    %162 = vmatprep.subr.bf16.mxu0 0
    %163 = vmatpush2.bf16.msra.mxu0 0
    %164 = vmatprep.subr.bf16.mxu0 0
    %165 = vmatpush2.bf16.msra.mxu0 0
    %166 = vmatprep.mubr.bf16.mxu0 0
    %167 = vmatmul.mubr.bf16.gmra.mxu0 %v132
    %v168 = vpop.f32.mrf.mxu0
    %v169 = vadd.f32 %v112, %v168
    %v170 = vpop.f32.mrf.mxu0
    %v171 = vpop.f32.mrf.mxu0
    %v172 = vadd.f32 %v115, %v171
    %v173 = vpop.f32.mrf.mxu0
    %174 = vdwg.mxu0
    %v175 = vld [vmem:[%s4] sm:$0x1]
    %v177 = vlaneseq
    %v178 = vshrl.u32 %v177, 7
    %v179 = vsub.s32 0, %v178
    %v180 = vrot.slane %v175, %v179
    %v182 = vadd.f32 %v169, %v180
    %v183 = vadd.f32 %v172, %v180
    %v184 = vxor.u32 %v182, 2147483648
    %v185 = vxor.u32 %v183, 2147483648
    %v186 = vmul.f32 %v184, 1.442695
    %v187 = vpow.pop %v186
    %v188 = vmul.f32 %v185, 1.442695
    %v189 = vpow.pop %v188
    %v190 = vadd.f32 %v187, 1.0
    %v191 = vadd.f32 %v189, 1.0
    %v192 = vrcp.pop %v190
    %v193 = vmul.f32 1.0, %v192
    %v194 = vrcp.pop %v191
    %v195 = vmul.f32 1.0, %v194
    %v196 = vmul.f32 %v193, %v31
    %v197 = vmul.f32 %v195, %v32
    %v198 = vpack.c.bf16 %v197, %v196
    %v199 = vld [vmem:[%s5] sm:$0xf]
    %v200 = vld [vmem:[%s5 + $0x4] sm:$0xf]
    %v201 = vld [vmem:[%s5 + $0x8] sm:$0xf]
    %v202 = vld [vmem:[%s5 + $0xc] sm:$0xf]
    %v203 = vld [vmem:[%s6] sm:$0xf]
    %v204 = vld [vmem:[%s6 + $0x4] sm:$0xf]
    %v205 = vld [vmem:[%s6 + $0x8] sm:$0xf]
    %v206 = vld [vmem:[%s6 + $0xc] sm:$0xf]
    %v207 = vld [vmem:[%s6 + $0x10] sm:$0xf]
    %v208 = vld [vmem:[%s6 + $0x14] sm:$0xf]
    %v209 = vld [vmem:[%s6 + $0x18] sm:$0xf]
    %v210 = vld [vmem:[%s6 + $0x1c] sm:$0xf]
    %v219 = vunpack.c.l.b16 %v203
    %v220 = vunpack.c.l.b16 %v204
    %v221 = vunpack.c.l.b16 %v205
    %v222 = vunpack.c.l.b16 %v206
    %v223 = vunpack.c.l.b16 %v207
    %v224 = vunpack.c.l.b16 %v208
    %v225 = vunpack.c.l.b16 %v209
    %v226 = vunpack.c.l.b16 %v210
    %v227 = vpack.c.b16 %v220, %v219
    %v228 = vpack.c.b16 %v222, %v221
    %v229 = vpack.c.b16 %v224, %v223
    %v230 = vpack.c.b16 %v226, %v225
    %235 = vmatprep.subr.bf16.mxu0 0
    %236 = vmatpush1.bf16.msra.mxu0 0
    %237 = vmatprep.subr.bf16.mxu0 0
    %238 = vmatpush1.bf16.msra.mxu0 0
    %239 = vmatprep.subr.bf16.mxu0 0
    %240 = vmatpush1.bf16.msra.mxu0 0
    %241 = vmatprep.subr.bf16.mxu0 0
    %242 = vmatpush1.bf16.msra.mxu0 0
    %243 = vmatprep.subr.bf16.mxu0 0
    %244 = vmatpush1.bf16.msra.mxu0 %v230
    %245 = vmatprep.subr.bf16.mxu0 0
    %246 = vmatpush1.bf16.msra.mxu0 %v229
    %247 = vmatprep.subr.bf16.mxu0 0
    %248 = vmatpush1.bf16.msra.mxu0 %v228
    %249 = vmatprep.subr.bf16.mxu0 0
    %250 = vmatpush1.bf16.msra.mxu0 %v227
    %251 = vmatprep.subr.bf16.mxu0 0
    %252 = vmatpush2.bf16.msra.mxu0 0
    %253 = vmatprep.subr.bf16.mxu0 0
    %254 = vmatpush2.bf16.msra.mxu0 0
    %255 = vmatprep.subr.bf16.mxu0 0
    %256 = vmatpush2.bf16.msra.mxu0 0
    %257 = vmatprep.subr.bf16.mxu0 0
    %258 = vmatpush2.bf16.msra.mxu0 0
    %259 = vmatprep.subr.bf16.mxu0 0
    %260 = vmatpush2.bf16.msra.mxu0 0
    %261 = vmatprep.subr.bf16.mxu0 0
    %262 = vmatpush2.bf16.msra.mxu0 0
    %263 = vmatprep.subr.bf16.mxu0 0
    %264 = vmatpush2.bf16.msra.mxu0 0
    %265 = vmatprep.subr.bf16.mxu0 0
    %266 = vmatpush2.bf16.msra.mxu0 0
    %267 = vmatprep.mubr.bf16.mxu0 0
    %268 = vmatmul.mubr.bf16.gmra.mxu0 %v75
    %v269 = vpop.f32.mrf.mxu0
    %v270 = vadd.f32 0.0, %v269
    %v271 = vpop.f32.mrf.mxu0
    %v272 = vpop.f32.mrf.mxu0
    %v273 = vadd.f32 0.0, %v272
    %v274 = vpop.f32.mrf.mxu0
    %275 = vdwg.mxu0
    %v280 = vunpack.c.l.b16 %v199
    %v281 = vunpack.c.l.b16 %v200
    %v282 = vunpack.c.l.b16 %v201
    %v283 = vunpack.c.l.b16 %v202
    %v284 = vpack.c.b16 %v281, %v280
    %v285 = vpack.c.b16 %v283, %v282
    %v289 = vsel %vm130, %v198, 0
    %291 = vmatprep.subr.bf16.mxu0 0
    %292 = vmatpush1.bf16.msra.mxu0 0
    %293 = vmatprep.subr.bf16.mxu0 0
    %294 = vmatpush1.bf16.msra.mxu0 0
    %295 = vmatprep.subr.bf16.mxu0 0
    %296 = vmatpush1.bf16.msra.mxu0 0
    %297 = vmatprep.subr.bf16.mxu0 0
    %298 = vmatpush1.bf16.msra.mxu0 0
    %299 = vmatprep.subr.bf16.mxu0 0
    %300 = vmatpush1.bf16.msra.mxu0 0
    %301 = vmatprep.subr.bf16.mxu0 0
    %302 = vmatpush1.bf16.msra.mxu0 0
    %303 = vmatprep.subr.bf16.mxu0 0
    %304 = vmatpush1.bf16.msra.mxu0 %v285
    %305 = vmatprep.subr.bf16.mxu0 0
    %306 = vmatpush1.bf16.msra.mxu0 %v284
    %307 = vmatprep.subr.bf16.mxu0 0
    %308 = vmatpush2.bf16.msra.mxu0 0
    %309 = vmatprep.subr.bf16.mxu0 0
    %310 = vmatpush2.bf16.msra.mxu0 0
    %311 = vmatprep.subr.bf16.mxu0 0
    %312 = vmatpush2.bf16.msra.mxu0 0
    %313 = vmatprep.subr.bf16.mxu0 0
    %314 = vmatpush2.bf16.msra.mxu0 0
    %315 = vmatprep.subr.bf16.mxu0 0
    %316 = vmatpush2.bf16.msra.mxu0 0
    %317 = vmatprep.subr.bf16.mxu0 0
    %318 = vmatpush2.bf16.msra.mxu0 0
    %319 = vmatprep.subr.bf16.mxu0 0
    %320 = vmatpush2.bf16.msra.mxu0 0
    %321 = vmatprep.subr.bf16.mxu0 0
    %322 = vmatpush2.bf16.msra.mxu0 0
    %323 = vmatprep.mubr.bf16.mxu0 0
    %324 = vmatmul.mubr.bf16.gmra.mxu0 %v289
    %v325 = vpop.f32.mrf.mxu0
    %v326 = vadd.f32 %v270, %v325
    %v327 = vpop.f32.mrf.mxu0
    %v328 = vpop.f32.mrf.mxu0
    %v329 = vadd.f32 %v273, %v328
    %v330 = vpop.f32.mrf.mxu0
    %331 = vdwg.mxu0
    %v332 = vld [vmem:[%s7] sm:$0x1]
    %v334 = vlaneseq
    %v335 = vshrl.u32 %v334, 7
    %v336 = vsub.s32 0, %v335
    %v337 = vrot.slane %v332, %v336
    %v339 = vadd.f32 %v326, %v337
    %v340 = vadd.f32 %v329, %v337
    %v341 = vtanh.pop %v339
    %v342 = vtanh.pop %v340
    %v343 = vsub.f32 1.0, %v193
    %v344 = vsub.f32 1.0, %v195
    %347 = vrot.lane.b32.xlu0 %v31, 32
    %v348 = vpop.permute.xlu0 %347
    %349 = vrot.lane.b32.xlu0 %v32, 32
    %v350 = vpop.permute.xlu0 %349
    %v353 = vmul.f32 %v343, %v348
    %v354 = vmul.f32 %v344, %v350
    %357 = vrot.lane.b32.xlu0 %v341, 32
    %v358 = vpop.permute.xlu0 %357
    %359 = vrot.lane.b32.xlu0 %v342, 32
    %v360 = vpop.permute.xlu0 %359
    %v363 = vmul.f32 %v193, %v358
    %v364 = vmul.f32 %v195, %v360
    %v365 = vadd.f32 %v353, %v363
    %v366 = vadd.f32 %v354, %v364
    %369 = vrot.lane.b32.xlu0 %v365, 96
    %v370 = vpop.permute.xlu0 %369
    %371 = vrot.lane.b32.xlu0 %v366, 96
    %v372 = vpop.permute.xlu0 %371
    %375 = vst.msk [vmem:[#allocation2] sm:$0xff] %vm130, %v370
    %376 = vst.msk [vmem:[#allocation2 + $0x8] sm:$0xff] %vm130, %v372
    // Predicated region
    $region34: #{gate_layer.1} parent=1 // pred_check
      _
    $region35: #{gate_layer.1} parent=1 // pred_check_branch
      %378 = sbr.rel (0) target = $region37
    $region36: #{gate_layer.1} parent=1 // pred_region
      %s380 = ssub.s32 256, 256
      %381 = vsyncadd [#allocation3], %s380
      %s382 = sshll.u32 [#allocation2], 4
      %s383 = int_to_ptr.vmem [resolvable:$true] %s382
      %388 = dma.vmem_to_hbm [thread:$0]  %s383, 256, %s8, [#allocation3], 128, 128, 8
    $region37: #{gate_layer.1} parent=1 // pred_fallthru
      _
    // Predicated region
    $region38: #{gate_layer.1} parent=1 // pred_check
      _
    $region39: #{gate_layer.1} parent=1 // pred_check_branch
      %390 = sbr.rel (0) target = $region41
    $region40: #{gate_layer.1} parent=1 // pred_region
      %391 = dma.done [#allocation3], 256
    $region41: #{gate_layer.1} parent=1 // pred_fallthru
      _
    %392 = vsyncpa [#allocation3], 1

</llo_original>
